<compile_context>
chip_gen: v7x
topology: tpu7x:2x2x1
jax: 0.10.0
libtpu: 0.0.40
codegen_flags: <defaults>
</compile_context>

<pallas_src>
import collections
import functools

import jax
import jax.numpy as jnp
from jax.experimental import pallas as pl
from jax.experimental.pallas import tpu as pltpu


_MiB = 1024 * 1024
_TARGET_BLOCK_BYTES = 4 * _MiB          # per-buffer block size for the apply path
_LANE_WIDTHS = (2048, 1024, 512, 256, 128)

_Budgets = collections.namedtuple("_Budgets", ["vmem_limit", "fuse_cost_limit"])


def _round_up(a, b):
    return (a + b - 1) // b * b


@functools.lru_cache(maxsize=1)
def _tpu_budgets():
    """Generation-aware scoped-VMEM limit and fused-path VMEM-cost threshold."""
    vmem_cap = None
    try:
        vmem_cap = int(pltpu.get_tpu_info().vmem_capacity_bytes)
    except Exception:
        vmem_cap = None
    if vmem_cap is None:
        try:
            kind = jax.devices()[0].device_kind.lower()
        except Exception:
            kind = ""
        if "v7" in kind:
            vmem_cap = 64 * _MiB
        elif "v5" in kind or "v6" in kind:
            vmem_cap = 128 * _MiB
    if vmem_cap is None:
        # Unknown part: conservative budgets that are safe on v5e/v6e/v7x.
        return _Budgets(vmem_limit=48 * _MiB, fuse_cost_limit=16 * _MiB)
    if vmem_cap <= 96 * _MiB:
        # v7x-like: 64 MiB per TensorCore, 2 TCs per chip -> modest scoped budget
        # and an early switch to the gridded two-pass path (uses both TCs).
        return _Budgets(vmem_limit=44 * _MiB, fuse_cost_limit=16 * _MiB)
    # v5e / v6e: 128 MiB physical VMEM, single TensorCore -> extend the
    # read-once (2x HBM bytes) fused regime as far as it safely goes.
    return _Budgets(vmem_limit=96 * _MiB, fuse_cost_limit=80 * _MiB)


def _fused_kernel(x_ref, o_ref, *, multiplier, inv_count):
    """Whole slab resident in VMEM: global mean + mask + scale in one pass.

    Any zero padding (ragged fallback only) contributes nothing to the sum;
    `inv_count` is 1 / true_element_count so the mean stays exact.
    """
    xf = x_ref[...].astype(jnp.float32)
    mean = jnp.sum(xf) * jnp.float32(inv_count)
    o_ref[...] = jnp.where(
        xf > mean, xf * jnp.float32(multiplier), jnp.float32(0.0)
    ).astype(o_ref.dtype)


def _apply_kernel(mean_ref, x_ref, o_ref, *, multiplier):
    """out = where(x > mean, x * multiplier, 0); compare/scale done in float32."""
    xf = x_ref[...].astype(jnp.float32)
    mean = mean_ref[0]                       # f32 scalar from SMEM
    o_ref[...] = jnp.where(
        xf > mean, xf * jnp.float32(multiplier), jnp.float32(0.0)
    ).astype(o_ref.dtype)


def my_dropout2(x, p=0.5, training=True, *, _force_two_pass=False):
    """Pallas implementation of MyDropout2.forward."""
    if not training:
        return x
    multiplier = (1.0 / (1.0 - p)) if p < 1 else 0.0

    orig_shape = x.shape
    total = x.size
    if total == 0:
        return x

    budgets = _tpu_budgets()

    # Adaptive lane-dense view: largest power-of-two width (>=128) dividing the
    # element count -> aligned tensors get a FREE reshape; no pad/slice copies.
    width = next((w for w in _LANE_WIDTHS if total % w == 0), None)
    padded = width is None
    if padded:
        # TODO(synk): ragged element counts still pay one jnp.pad + final slice
        # round-trip; an aligned-body + tiny-tail kernel split would remove it.
        width = 512
        padded_total = _round_up(total, width)
        flat = jnp.pad(x.reshape(-1), (0, padded_total - total))
    else:
        padded_total = total
        flat = x.reshape(-1)

    rows = padded_total // width
    x2 = flat.reshape(rows, width)

    itemsize = x2.dtype.itemsize
    slab_bytes = padded_total * itemsize
    # Fused-kernel VMEM cost estimate: input + output slabs + f32 working copies.
    fused_cost = 2 * slab_bytes + 2 * padded_total * 4

    use_fused = (
        (fused_cost <= budgets.fuse_cost_limit and not _force_two_pass)
        or rows < 16  # tiny slabs: single fused launch always wins
    )

    if use_fused:
        # Single fused pass: read once, write once (2x HBM bytes).
        out2 = pl.pallas_call(
            functools.partial(
                _fused_kernel, multiplier=multiplier, inv_count=1.0 / float(total)
            ),
            out_shape=jax.ShapeDtypeStruct((rows, width), x.dtype),
            in_specs=[pl.BlockSpec(memory_space=pltpu.MemorySpace.VMEM)],
            out_specs=pl.BlockSpec(memory_space=pltpu.MemorySpace.VMEM),
            compiler_params=pltpu.CompilerParams(
                vmem_limit_bytes=budgets.vmem_limit
            ),
        )(x2)
    else:
        # Pass 1: global mean via XLA's native reduction (HBM-roofline; dtype=f32
        # keeps any bf16 upcast fused into the reduction instead of materializing).
        mean = jnp.mean(x, dtype=jnp.float32).reshape(1)

        # Pass 2: tiled lane-dense apply. ~4 MiB blocks amortize the ~0.35 us
        # per-grid-step overhead; tr is clamped so there are always >= 2 grid
        # steps (keeps both v7x TensorCores busy just above the fuse threshold).
        target_rows = max(8, (_TARGET_BLOCK_BYTES // (width * itemsize)) // 8 * 8)
        tr = min(target_rows, _round_up(pl.cdiv(rows, 2), 8))
        grid = (pl.cdiv(rows, tr),)      # ragged last block handled by Pallas
        out2 = pl.pallas_call(
            functools.partial(_apply_kernel, multiplier=multiplier),
            out_shape=jax.ShapeDtypeStruct((rows, width), x.dtype),
            grid=grid,
            in_specs=[
                pl.BlockSpec(memory_space=pltpu.MemorySpace.SMEM),   # mean (1,)
                pl.BlockSpec((tr, width), lambda i: (i, 0)),
            ],
            out_specs=pl.BlockSpec((tr, width), lambda i: (i, 0)),
            compiler_params=pltpu.CompilerParams(
                dimension_semantics=("parallel",),
                vmem_limit_bytes=budgets.vmem_limit,
            ),
        )(mean, x2)

    if padded:
        return out2.reshape(-1)[:total].reshape(orig_shape)
    return out2.reshape(orig_shape)


if __name__ == "__main__":
    key = jax.random.PRNGKey(0)
    x = jax.random.normal(key, (2, 4, 16, 16), dtype=jnp.float32)  # NCHW

    # Reference (pure JAX): multiplier = 1 / (1 - 0.5) = 2.
    ref = jnp.where(x > jnp.mean(x), x * 2.0, 0.0)

    # Aligned tensor (2048 elems) -> fused single-pass path, no pad/slice copies.
    out = jax.block_until_ready(my_dropout2(x, p=0.5, training=True))
    assert out.shape == x.shape and out.dtype == x.dtype
    assert jnp.allclose(out, ref, atol=1e-5, rtol=1e-5)

    # Aligned, larger tensor forced through the two-pass tiled path (grid >= 2).
    x_big = jax.random.normal(jax.random.PRNGKey(2), (8, 8, 32, 32), dtype=jnp.float32)
    ref_big = jnp.where(x_big > jnp.mean(x_big), x_big * 2.0, 0.0)
    out_big = jax.block_until_ready(
        my_dropout2(x_big, p=0.5, training=True, _force_two_pass=True)
    )
    assert jnp.allclose(out_big, ref_big, atol=1e-5, rtol=1e-5)

    # Ragged element count exercises the padded fallback (fused path).
    x_odd = jax.random.normal(jax.random.PRNGKey(1), (3, 5, 7, 9), dtype=jnp.float32)
    ref_odd = jnp.where(x_odd > jnp.mean(x_odd), x_odd * 2.0, 0.0)
    out_odd = jax.block_until_ready(my_dropout2(x_odd, p=0.5, training=True))
    assert jnp.allclose(out_odd, ref_odd, atol=1e-5, rtol=1e-5)

    # Ragged + forced two-pass (padded rows, partial last grid block).
    x_odd2 = jax.random.normal(jax.random.PRNGKey(3), (3, 5, 33, 37), dtype=jnp.float32)
    ref_odd2 = jnp.where(x_odd2 > jnp.mean(x_odd2), x_odd2 * 2.0, 0.0)
    out_odd2 = jax.block_until_ready(
        my_dropout2(x_odd2, p=0.5, training=True, _force_two_pass=True)
    )
    assert jnp.allclose(out_odd2, ref_odd2, atol=1e-5, rtol=1e-5)

    # Eval mode is identity.
    assert jnp.array_equal(my_dropout2(x, p=0.5, training=False), x)

    print("KERNEL_OK")
</pallas_src>

<mosaic_0001>
module attributes {stable_mosaic.version = 11 : i64} {
  func.func @_fused_kernel(%arg0: memref<1x2048xf32, #tpu.memory_space<vmem>>, %arg1: memref<1x2048xf32, #tpu.memory_space<vmem>>) attributes {dimension_semantics = [], scalar_prefetch = 0 : i64, scratch_operands = 0 : i64, tpu.core_type = #tpu.core_type<tc>} {
    %c0 = arith.constant 0 : index
    %c0_0 = arith.constant 0 : index
    %0 = vector.load %arg0[%c0, %c0_0] : memref<1x2048xf32, #tpu.memory_space<vmem>>, vector<1x2048xf32>
    %1 = vector.shape_cast %0 : vector<1x2048xf32> to vector<1x1x2048xf32>
    %cst = arith.constant dense<0.000000e+00> : vector<1xf32>
    %2 = vector.multi_reduction <add>, %1, %cst [1, 2] : vector<1x1x2048xf32> to vector<1xf32>
    %3 = vector.shape_cast %2 : vector<1xf32> to vector<1x1x1xf32>
    %4 = vector.extract %3[0, 0, 0] : f32 from vector<1x1x1xf32>
    %cst_1 = arith.constant 4.8828125E-4 : f32
    %5 = arith.mulf %4, %cst_1 : f32
    %6 = vector.broadcast %5 : f32 to vector<1x2048xf32>
    %7 = arith.cmpf ogt, %0, %6 : vector<1x2048xf32>
    %cst_2 = arith.constant 2.000000e+00 : f32
    %8 = vector.broadcast %cst_2 : f32 to vector<1x2048xf32>
    %9 = arith.mulf %0, %8 : vector<1x2048xf32>
    %cst_3 = arith.constant 0.000000e+00 : f32
    %10 = vector.broadcast %cst_3 : f32 to vector<1x2048xf32>
    %11 = arith.select %7, %9, %10 : vector<1x2048xi1>, vector<1x2048xf32>
    %c0_4 = arith.constant 0 : index
    %c0_5 = arith.constant 0 : index
    %12 = vector.load %arg1[%c0_4, %c0_5] : memref<1x2048xf32, #tpu.memory_space<vmem>>, vector<1x2048xf32>
    tpu.vector_store %arg1[%c0_4, %c0_5], %11 {strides = array<i32>} : memref<1x2048xf32, #tpu.memory_space<vmem>>, vector<1x2048xf32>,
    return
  }
}

</mosaic_0001>

<llo_original>
// kernel: tpu_custom_call.1
$region0: #{tpu_custom_call.1}
  #allocation0 [shape = 'u32[]', space=smem, size = 0x4, offset = 0x4, fixed_abs, tag = 'smem constant byte address 0x4 - core index']
  #allocation1 [shape = 'u32[144,128]{1,0:T(1,128)}', space=vmem, size = 0x12000, scoped, tag = 'internal scratch']
  %s0 = inlined_call_operand.hbm [shape: f32[1,2048], index: 0, kind: input, shape index: {}]
  %s1 = inlined_call_operand.hbm [shape: f32[1,2048], index: 1, kind: output, shape index: {}]
  %s2 = sld [smem:[#allocation0]]
  $region18: #{tpu_custom_call.1} parent=0
    _
  %s4 = ssub.s32 1, %s2
  %s5 = scalar_select 0, %s4, %s2
  $region1: #{tpu_custom_call.1} parent=0
    #allocation2 [shape = 'u8[8192]{0}', space=vmem, size = 0x2000, scoped, tag = 'input window, operand 0, single buffered']
    #allocation3 [shape = 's32[1]{0}', space=sflag, size = 0x4, scoped, tag = 'scoped memory for tpu_custom_call.1']
    #allocation4 [shape = 's32[1]{0}', space=sflag, size = 0x4, scoped, tag = 'scoped memory for tpu_custom_call.1']
    #allocation5 [shape = 'u8[8192]{0}', space=vmem, size = 0x2000, scoped, tag = 'output window, operand 0, single buffered']
    %6 = vsyncpa [#allocation3], 0
    %7 = vsyncpa [#allocation4], 0
    // Predicated region
    $region2: #{tpu_custom_call.1} parent=1 // pred_check
      _
    $region3: #{tpu_custom_call.1} parent=1 // pred_check_branch
      %9 = sbr.rel (0) target = $region5
    $region4: #{tpu_custom_call.1} parent=1 // pred_region
      %s11 = ssub.s32 256, 256
      %12 = vsyncadd [#allocation3], %s11
      %s14 = sshll.u32 [#allocation2], 4
      %s15 = int_to_ptr.vmem [resolvable:$true] %s14
      %17 = dma.hbm_to_vmem [thread:$0]  %s0, 256, %s15, [#allocation3]
    $region5: #{tpu_custom_call.1} parent=1 // pred_fallthru
      _
    // Predicated region
    $region6: #{tpu_custom_call.1} parent=1 // pred_check
      _
    $region7: #{tpu_custom_call.1} parent=1 // pred_check_branch
      %19 = sbr.rel (0) target = $region9
    $region8: #{tpu_custom_call.1} parent=1 // pred_region
      %20 = dma.done [#allocation3], 256
    $region9: #{tpu_custom_call.1} parent=1 // pred_fallthru
      _
    %v21 = vld [vmem:[#allocation2] sm:$0xff]
    %v22 = vld [vmem:[#allocation2 + $0x8] sm:$0xff]
    %v25 = vlaneseq
    %v26 = vshrl.u32 %v25, 7
    %v27 = vsub.s32 0, %v26
    %v28 = vrot.slane %v21, %v27
    %v29 = vlaneseq
    %v30 = vshrl.u32 %v29, 7
    %v31 = vsub.s32 1, %v30
    %v32 = vrot.slane %v21, %v31
    %v33 = vlaneseq
    %v34 = vshrl.u32 %v33, 7
    %v35 = vsub.s32 2, %v34
    %v36 = vrot.slane %v21, %v35
    %v37 = vlaneseq
    %v38 = vshrl.u32 %v37, 7
    %v39 = vsub.s32 3, %v38
    %v40 = vrot.slane %v21, %v39
    %v41 = vlaneseq
    %v42 = vshrl.u32 %v41, 7
    %v43 = vsub.s32 4, %v42
    %v44 = vrot.slane %v21, %v43
    %v45 = vlaneseq
    %v46 = vshrl.u32 %v45, 7
    %v47 = vsub.s32 5, %v46
    %v48 = vrot.slane %v21, %v47
    %v49 = vlaneseq
    %v50 = vshrl.u32 %v49, 7
    %v51 = vsub.s32 6, %v50
    %v52 = vrot.slane %v21, %v51
    %v53 = vlaneseq
    %v54 = vshrl.u32 %v53, 7
    %v55 = vsub.s32 7, %v54
    %v56 = vrot.slane %v21, %v55
    %v57 = vlaneseq
    %v58 = vshrl.u32 %v57, 7
    %v59 = vsub.s32 0, %v58
    %v60 = vrot.slane %v22, %v59
    %v61 = vlaneseq
    %v62 = vshrl.u32 %v61, 7
    %v63 = vsub.s32 1, %v62
    %v64 = vrot.slane %v22, %v63
    %v65 = vlaneseq
    %v66 = vshrl.u32 %v65, 7
    %v67 = vsub.s32 2, %v66
    %v68 = vrot.slane %v22, %v67
    %v69 = vlaneseq
    %v70 = vshrl.u32 %v69, 7
    %v71 = vsub.s32 3, %v70
    %v72 = vrot.slane %v22, %v71
    %v73 = vlaneseq
    %v74 = vshrl.u32 %v73, 7
    %v75 = vsub.s32 4, %v74
    %v76 = vrot.slane %v22, %v75
    %v77 = vlaneseq
    %v78 = vshrl.u32 %v77, 7
    %v79 = vsub.s32 5, %v78
    %v80 = vrot.slane %v22, %v79
    %v81 = vlaneseq
    %v82 = vshrl.u32 %v81, 7
    %v83 = vsub.s32 6, %v82
    %v84 = vrot.slane %v22, %v83
    %v85 = vlaneseq
    %v86 = vshrl.u32 %v85, 7
    %v87 = vsub.s32 7, %v86
    %v88 = vrot.slane %v22, %v87
    %vm105 = vcmask 1040384
    %v106 = vsel %vm105, %v28, 0.0
    %v107 = vsel %vm105, %v32, 0.0
    %v108 = vadd.f32 %v106, %v107
    %v109 = vsel %vm105, %v36, 0.0
    %v110 = vadd.f32 %v108, %v109
    %v111 = vsel %vm105, %v40, 0.0
    %v112 = vadd.f32 %v110, %v111
    %v113 = vsel %vm105, %v44, 0.0
    %v114 = vadd.f32 %v112, %v113
    %v115 = vsel %vm105, %v48, 0.0
    %v116 = vadd.f32 %v114, %v115
    %v117 = vsel %vm105, %v52, 0.0
    %v118 = vadd.f32 %v116, %v117
    %v119 = vsel %vm105, %v56, 0.0
    %v120 = vadd.f32 %v118, %v119
    %v121 = vsel %vm105, %v60, 0.0
    %v122 = vadd.f32 %v120, %v121
    %v123 = vsel %vm105, %v64, 0.0
    %v124 = vadd.f32 %v122, %v123
    %v125 = vsel %vm105, %v68, 0.0
    %v126 = vadd.f32 %v124, %v125
    %v127 = vsel %vm105, %v72, 0.0
    %v128 = vadd.f32 %v126, %v127
    %v129 = vsel %vm105, %v76, 0.0
    %v130 = vadd.f32 %v128, %v129
    %v131 = vsel %vm105, %v80, 0.0
    %v132 = vadd.f32 %v130, %v131
    %v133 = vsel %vm105, %v84, 0.0
    %v134 = vadd.f32 %v132, %v133
    %v135 = vsel %vm105, %v88, 0.0
    %v136 = vadd.f32 %v134, %v135
    %137 = vadd.xlane.f32.xlu0 %v136
    %v138 = vpop.xlane.xlu0 %137
    %v139 = vrot.slane %v138, 4
    %v140 = vadd.f32 %v138, %v139
    %v141 = vrot.slane %v140, 2
    %v142 = vadd.f32 %v140, %v141
    %v143 = vrot.slane %v142, 1
    %v144 = vadd.f32 %v142, %v143
    %s145 = vtos %v144
    %s146 = smul.f32 %s145, 0.00048828125
    %v147 = vstv %s146
    %vm148 = vcmp.gt.f32.partialorder %v21, %v147
    %vm149 = vcmp.gt.f32.partialorder %v22, %v147
    %v150 = vmul.f32 %v21, 2.0
    %v151 = vmul.f32 %v22, 2.0
    %v152 = vsel %vm148, %v150, 0.0
    %v153 = vsel %vm149, %v151, 0.0
    %154 = vst [vmem:[#allocation5] sm:$0xff] %v152
    %155 = vst [vmem:[#allocation5 + $0x8] sm:$0xff] %v153
    // Predicated region
    $region10: #{tpu_custom_call.1} parent=1 // pred_check
      _
    $region11: #{tpu_custom_call.1} parent=1 // pred_check_branch
      %157 = sbr.rel (0) target = $region13
    $region12: #{tpu_custom_call.1} parent=1 // pred_region
      %s159 = ssub.s32 256, 256
      %160 = vsyncadd [#allocation4], %s159
      %s162 = sshll.u32 [#allocation5], 4
      %s163 = int_to_ptr.vmem [resolvable:$true] %s162
      %165 = dma.vmem_to_hbm [thread:$0]  %s163, 256, %s1, [#allocation4]
    $region13: #{tpu_custom_call.1} parent=1 // pred_fallthru
      _
    // Predicated region
    $region14: #{tpu_custom_call.1} parent=1 // pred_check
      _
    $region15: #{tpu_custom_call.1} parent=1 // pred_check_branch
      %167 = sbr.rel (0) target = $region17
    $region16: #{tpu_custom_call.1} parent=1 // pred_region
      %168 = dma.done [#allocation4], 256
    $region17: #{tpu_custom_call.1} parent=1 // pred_fallthru
      _
    %169 = vsyncpa [#allocation3], 1
    %170 = vsyncpa [#allocation4], 1

</llo_original>
